<compile_context>
chip_gen: v5e
topology: v5e:2x2
jax: 0.10.0
libtpu: 0.0.40
codegen_flags: <defaults>
</compile_context>

<pallas_src>
import functools

import jax
import jax.numpy as jnp
from jax.experimental import pallas as pl
from jax.experimental.pallas import tpu as pltpu


def _round_up(x, m):
    return ((x + m - 1) // m) * m


def _cdiv(a, b):
    return (a + b - 1) // b


# ---------------------------------------------------------------------------
# Kernel body
# ---------------------------------------------------------------------------
def critic_kernel(x_ref, w1_ref, b1_ref, w2_ref, b2_ref, w3_ref, b3_ref, out_ref):
    # x arrives as f32 (no wrapper-side cast pass over HBM); cast to bf16 only to feed the MXU.
    x = x_ref[...].astype(jnp.bfloat16)

    # Layer 1: bf16 MXU matmul with f32 accumulation; bias + ReLU in f32 on the VPU.
    h1 = jnp.dot(x, w1_ref[...], preferred_element_type=jnp.float32)
    h1 = jnp.maximum(h1 + b1_ref[...], 0.0)

    # Layer 2: same pattern (re-cast the activation to bf16 only for the MXU feed).
    h2 = jnp.dot(h1.astype(jnp.bfloat16), w2_ref[...], preferred_element_type=jnp.float32)
    h2 = jnp.maximum(h2 + b2_ref[...], 0.0)

    # Layer 3 (output width 1): VPU multiply + XLU lane-reduce instead of wasting the MXU on a
    # single output column.  b3 comes in as an SMEM scalar.
    w3_row = w3_ref[...].astype(jnp.float32)            # (1, Hp)
    v = jnp.sum(h2 * w3_row, axis=-1, keepdims=True)    # (TILE_B, 1)
    out_ref[...] = (v + b3_ref[0, 0]).astype(out_ref.dtype)
    # NOTE: a lane-dense (1, TILE_B) output slab would remove masked vst's, but it requires a
    # sublane->lane relayout of the reduce result and the output is tiny next to the layer-2
    # matmul, so the (TILE_B, 1) store is deliberately kept.


# ---------------------------------------------------------------------------
# Generation-aware tiling / VMEM budget
# ---------------------------------------------------------------------------
def _vmem_capacity_bytes():
    """Physical VMEM per core; conservative 64 MiB (v7x-like) fallback if the query fails."""
    try:
        info = pltpu.get_tpu_info()
        for name in ("vmem_capacity_bytes", "vmem_bytes", "vmem_size_bytes"):
            v = getattr(info, name, None)
            if v:
                return int(v)
    except Exception:
        pass
    return 64 * 1024 * 1024


def _pick_tiling(B, din, hp):
    """Pick (batch tile, scoped VMEM limit) from the device's VMEM capacity."""
    cap = _vmem_capacity_bytes()
    # Leave ~16 MiB headroom for compiler scratch; never ask for more than 100 MiB.
    vmem_limit = int(max(32 << 20, min(cap - (16 << 20), 100 << 20)))

    # Resident weights (bf16) + biases (f32); budget x2 so the double-buffered fallback fits too.
    weight_bytes = 2 * (din * hp + hp * hp + hp) + 8 * hp
    # Per batch row: f32 x (double-buffered) + f32 out (double-buffered) + a generous 2x
    # allowance for the f32 h1/h2 temporaries materialised in the kernel body.
    per_row = 8 * din + 8 + 16 * hp
    budget = vmem_limit - 2 * weight_bytes - (4 << 20)
    max_tb = (budget // per_row) // 256 * 256 if budget > 0 else 0
    max_tb = int(min(1024, max(128, max_tb)))

    if B <= max_tb:
        if B <= 512:
            tb = B  # single block; block dims == array dims is always a legal tiling
        else:
            # Aim for >= ~4 grid steps so megacore / the x-stream pipeline has work to overlap.
            tb = min(max_tb, max(256, _round_up(_cdiv(B, 4), 256)))
    else:
        tb = max_tb
    return tb, vmem_limit


# TODO(synk): for hidden dims where single-buffered w2 (hp^2 * 2 bytes) no longer fits the VMEM
# budget, add a second grid axis over hp chunks for layer 2 with an f32 accumulator scratch and
# pl.when init/finalize instead of requiring all weights resident.


# ---------------------------------------------------------------------------
# One-time parameter prep (hoisted out of the per-call path)
# ---------------------------------------------------------------------------
def prepare_critic_params(params):
    """Pad hidden dim to a multiple of 128 lanes and cast weights to bf16, once.

    Bias pads MUST stay zero — that is what keeps the hidden-dim zero padding inert through
    ReLU and the final reduction.  din is intentionally left unpadded: x streams as f32 and a
    per-call pad of x would re-introduce the extra HBM pass this prep removes; layer 1's K dim
    is small next to the hidden x hidden layer 2.
    """
    w1, b1 = params["w1"], params["b1"]
    w2, b2 = params["w2"], params["b2"]
    w3, b3 = params["w3"], params["b3"]
    din, hidden = w1.shape
    hp = _round_up(hidden, 128)
    ph = hp - hidden
    return {
        "w1": jnp.pad(w1, ((0, 0), (0, ph))).astype(jnp.bfloat16),
        "b1": jnp.pad(jnp.asarray(b1, jnp.float32).reshape(1, hidden), ((0, 0), (0, ph))),
        "w2": jnp.pad(w2, ((0, ph), (0, ph))).astype(jnp.bfloat16),
        "b2": jnp.pad(jnp.asarray(b2, jnp.float32).reshape(1, hidden), ((0, 0), (0, ph))),
        "w3": jnp.pad(jnp.asarray(w3).reshape(1, hidden), ((0, 0), (0, ph))).astype(jnp.bfloat16),
        "b3": jnp.asarray(b3, jnp.float32).reshape(1, 1),
    }


# ---------------------------------------------------------------------------
# pallas_call wrapper
# ---------------------------------------------------------------------------
@functools.partial(jax.jit, static_argnames=("tb", "vmem_limit", "single_buffer_weights"))
def _critic_pallas(x, w1, b1, w2, b2, w3, b3, *, tb, vmem_limit, single_buffer_weights):
    B, din = x.shape
    hp = w1.shape[1]
    grid = (_cdiv(B, tb),)

    wkw = {"pipeline_mode": pl.Buffered(1)} if single_buffer_weights else {}
    const = lambda shape: pl.BlockSpec(shape, lambda i: (0, 0), **wkw)

    return pl.pallas_call(
        critic_kernel,
        out_shape=jax.ShapeDtypeStruct((B, 1), jnp.float32),
        grid=grid,
        in_specs=[
            pl.BlockSpec((tb, din), lambda i: (i, 0)),            # x: streamed over batch
            const((din, hp)), const((1, hp)),                     # w1, b1 (VMEM-resident)
            const((hp, hp)), const((1, hp)),                      # w2, b2 (VMEM-resident)
            const((1, hp)),                                       # w3 as lane-aligned row
            pl.BlockSpec(memory_space=pltpu.MemorySpace.SMEM),    # b3 scalar in SMEM
        ],
        out_specs=pl.BlockSpec((tb, 1), lambda i: (i, 0)),
        compiler_params=pltpu.CompilerParams(
            dimension_semantics=("parallel",),   # batch axis independent -> megacore/TC split
            vmem_limit_bytes=vmem_limit,
        ),
    )(x, w1, b1, w2, b2, w3, b3)


def critic_forward(x, prepared):
    """x: (B, input_dim) float32; prepared: output of prepare_critic_params. Returns (B, 1) f32."""
    B, din = x.shape
    hp = prepared["w1"].shape[1]
    tb, vmem_limit = _pick_tiling(B, din, hp)
    args = (jnp.asarray(x, jnp.float32), prepared["w1"], prepared["b1"],
            prepared["w2"], prepared["b2"], prepared["w3"], prepared["b3"])
    try:
        return _critic_pallas(*args, tb=tb, vmem_limit=vmem_limit, single_buffer_weights=True)
    except Exception:
        # Graceful fallback if this jax build rejects pl.Buffered(1) single-buffering:
        # identical math, default double-buffered weight windows (just ~2x weight VMEM).
        return _critic_pallas(*args, tb=tb, vmem_limit=vmem_limit, single_buffer_weights=False)


# ---------------------------------------------------------------------------
# Init + demo
# ---------------------------------------------------------------------------
def init_critic_params(key, input_dim, hidden_dim):
    """Deterministic init mimicking torch.nn.Linear default: U(-1/sqrt(fan_in), 1/sqrt(fan_in))."""
    keys = jax.random.split(key, 6)

    def lin(kw, kb, fan_in, fan_out):
        bound = 1.0 / jnp.sqrt(jnp.float32(fan_in))
        w = jax.random.uniform(kw, (fan_in, fan_out), jnp.float32, -bound, bound)
        b = jax.random.uniform(kb, (1, fan_out), jnp.float32, -bound, bound)
        return w, b

    w1, b1 = lin(keys[0], keys[1], input_dim, hidden_dim)
    w2, b2 = lin(keys[2], keys[3], hidden_dim, hidden_dim)
    w3, b3 = lin(keys[4], keys[5], hidden_dim, 1)
    return {"w1": w1, "b1": b1, "w2": w2, "b2": b2, "w3": w3, "b3": b3}


if __name__ == "__main__":
    key = jax.random.PRNGKey(0)
    k_x, k_p = jax.random.split(key)

    batch, input_dim, hidden_dim = 8, 16, 32
    x = jax.random.normal(k_x, (batch, input_dim), jnp.float32)
    params = init_critic_params(k_p, input_dim, hidden_dim)

    prepared = prepare_critic_params(params)     # one-time pad + bf16 cast (hoisted out of forward)
    value = jax.block_until_ready(critic_forward(x, prepared))

    # Reference in plain f32 JAX (same semantics as the torch module).
    h1 = jnp.maximum(x @ params["w1"] + params["b1"], 0.0)
    h2 = jnp.maximum(h1 @ params["w2"] + params["b2"], 0.0)
    ref = h2 @ params["w3"] + params["b3"]

    assert value.shape == (batch, 1)
    # bf16 weight operands with f32 accumulation -> loosened tolerance vs pure-f32 reference.
    assert jnp.allclose(value, ref, atol=2e-2, rtol=2e-2), (value, ref)

    print("KERNEL_OK")
</pallas_src>

<mosaic_0001>
module attributes {stable_mosaic.version = 11 : i64} {
  func.func @critic_kernel(%arg0: i32, %arg1: memref<8x16xf32, #tpu.memory_space<vmem>>, %arg2: memref<16x128xbf16, #tpu.memory_space<vmem>>, %arg3: memref<1x128xf32, #tpu.memory_space<vmem>>, %arg4: memref<128x128xbf16, #tpu.memory_space<vmem>>, %arg5: memref<1x128xf32, #tpu.memory_space<vmem>>, %arg6: memref<1x128xbf16, #tpu.memory_space<vmem>>, %arg7: memref<1x1xf32, #tpu.memory_space<smem>>, %arg8: memref<8x1xf32, #tpu.memory_space<vmem>>) attributes {dimension_semantics = [#tpu.dimension_semantics<parallel>], iteration_bounds = array<i64: 1>, scalar_prefetch = 0 : i64, scratch_operands = 0 : i64, tpu.core_type = #tpu.core_type<tc>, window_params = [{transform_indices = @transform_0, window_bounds = array<i64: 8, 16>}, {pipeline_mode = #tpu.pipeline_mode<synchronous>, transform_indices = @transform_1, window_bounds = array<i64: 16, 128>}, {pipeline_mode = #tpu.pipeline_mode<synchronous>, transform_indices = @transform_2, window_bounds = array<i64: 1, 128>}, {pipeline_mode = #tpu.pipeline_mode<synchronous>, transform_indices = @transform_3, window_bounds = array<i64: 128, 128>}, {pipeline_mode = #tpu.pipeline_mode<synchronous>, transform_indices = @transform_4, window_bounds = array<i64: 1, 128>}, {pipeline_mode = #tpu.pipeline_mode<synchronous>, transform_indices = @transform_5, window_bounds = array<i64: 1, 128>}, {transform_indices = @transform_6, window_bounds = array<i64: 1, 1>}, {transform_indices = @transform_7, window_bounds = array<i64: 8, 1>}]} {
    %c0 = arith.constant 0 : index
    %c0_0 = arith.constant 0 : index
    %0 = vector.load %arg1[%c0, %c0_0] : memref<8x16xf32, #tpu.memory_space<vmem>>, vector<8x16xf32>
    %1 = arith.truncf %0 : vector<8x16xf32> to vector<8x16xbf16>
    %c0_1 = arith.constant 0 : index
    %c0_2 = arith.constant 0 : index
    %2 = vector.load %arg2[%c0_1, %c0_2] : memref<16x128xbf16, #tpu.memory_space<vmem>>, vector<16x128xbf16>
    %cst = arith.constant dense<0.000000e+00> : vector<8x128xf32>
    %3 = tpu.matmul %1, %2, %cst {dimension_numbers = #tpu.dot_dimension_numbers<[1], [0], [0], [1], [0, 0, 1, 1], [], []>} : vector<8x16xbf16>, vector<16x128xbf16>, vector<8x128xf32> -> vector<8x128xf32>
    %c0_3 = arith.constant 0 : index
    %c0_4 = arith.constant 0 : index
    %4 = vector.load %arg3[%c0_3, %c0_4] : memref<1x128xf32, #tpu.memory_space<vmem>>, vector<1x128xf32>
    %5 = vector.broadcast %4 : vector<1x128xf32> to vector<8x128xf32>
    %6 = arith.addf %3, %5 : vector<8x128xf32>
    %cst_5 = arith.constant 0.000000e+00 : f32
    %7 = vector.broadcast %cst_5 : f32 to vector<8x128xf32>
    %8 = arith.maximumf %6, %7 : vector<8x128xf32>
    %9 = arith.truncf %8 : vector<8x128xf32> to vector<8x128xbf16>
    %c0_6 = arith.constant 0 : index
    %c0_7 = arith.constant 0 : index
    %10 = vector.load %arg4[%c0_6, %c0_7] : memref<128x128xbf16, #tpu.memory_space<vmem>>, vector<128x128xbf16>
    %cst_8 = arith.constant dense<0.000000e+00> : vector<8x128xf32>
    %11 = tpu.matmul %9, %10, %cst_8 {dimension_numbers = #tpu.dot_dimension_numbers<[1], [0], [0], [1], [0, 0, 1, 1], [], []>} : vector<8x128xbf16>, vector<128x128xbf16>, vector<8x128xf32> -> vector<8x128xf32>
    %c0_9 = arith.constant 0 : index
    %c0_10 = arith.constant 0 : index
    %12 = vector.load %arg5[%c0_9, %c0_10] : memref<1x128xf32, #tpu.memory_space<vmem>>, vector<1x128xf32>
    %13 = vector.broadcast %12 : vector<1x128xf32> to vector<8x128xf32>
    %14 = arith.addf %11, %13 : vector<8x128xf32>
    %cst_11 = arith.constant 0.000000e+00 : f32
    %15 = vector.broadcast %cst_11 : f32 to vector<8x128xf32>
    %16 = arith.maximumf %14, %15 : vector<8x128xf32>
    %c0_12 = arith.constant 0 : index
    %c0_13 = arith.constant 0 : index
    %17 = vector.load %arg6[%c0_12, %c0_13] : memref<1x128xbf16, #tpu.memory_space<vmem>>, vector<1x128xbf16>
    %18 = arith.extf %17 : vector<1x128xbf16> to vector<1x128xf32>
    %19 = vector.broadcast %18 : vector<1x128xf32> to vector<8x128xf32>
    %20 = arith.mulf %16, %19 : vector<8x128xf32>
    %cst_14 = arith.constant dense<0.000000e+00> : vector<8xf32>
    %21 = vector.multi_reduction <add>, %20, %cst_14 [1] : vector<8x128xf32> to vector<8xf32>
    %22 = vector.shape_cast %21 : vector<8xf32> to vector<8x1xf32>
    %c0_15 = arith.constant 0 : index
    %c0_16 = arith.constant 0 : index
    %23 = memref.load %arg7[%c0_15, %c0_16] : memref<1x1xf32, #tpu.memory_space<smem>>
    %24 = vector.broadcast %23 : f32 to vector<8x1xf32>
    %25 = arith.addf %22, %24 : vector<8x1xf32>
    %c0_17 = arith.constant 0 : index
    %c0_18 = arith.constant 0 : index
    %26 = vector.load %arg8[%c0_17, %c0_18] : memref<8x1xf32, #tpu.memory_space<vmem>>, vector<8x1xf32>
    tpu.vector_store %arg8[%c0_17, %c0_18], %25 {strides = array<i32>} : memref<8x1xf32, #tpu.memory_space<vmem>>, vector<8x1xf32>,
    return
  }
  func.func @transform_0(%arg0: i32) -> (i32, i32) {
    %c0_i32 = arith.constant 0 : i32
    %c0_i32_0 = arith.constant 0 : i32
    return %arg0, %c0_i32 : i32, i32
  }
  func.func @transform_1(%arg0: i32) -> (i32, i32) {
    %c0_i32 = arith.constant 0 : i32
    %c0_i32_0 = arith.constant 0 : i32
    %c0_i32_1 = arith.constant 0 : i32
    return %c0_i32, %c0_i32_0 : i32, i32
  }
  func.func @transform_2(%arg0: i32) -> (i32, i32) {
    %c0_i32 = arith.constant 0 : i32
    %c0_i32_0 = arith.constant 0 : i32
    %c0_i32_1 = arith.constant 0 : i32
    return %c0_i32, %c0_i32_0 : i32, i32
  }
  func.func @transform_3(%arg0: i32) -> (i32, i32) {
    %c0_i32 = arith.constant 0 : i32
    %c0_i32_0 = arith.constant 0 : i32
    %c0_i32_1 = arith.constant 0 : i32
    return %c0_i32, %c0_i32_0 : i32, i32
  }
  func.func @transform_4(%arg0: i32) -> (i32, i32) {
    %c0_i32 = arith.constant 0 : i32
    %c0_i32_0 = arith.constant 0 : i32
    %c0_i32_1 = arith.constant 0 : i32
    return %c0_i32, %c0_i32_0 : i32, i32
  }
  func.func @transform_5(%arg0: i32) -> (i32, i32) {
    %c0_i32 = arith.constant 0 : i32
    %c0_i32_0 = arith.constant 0 : i32
    %c0_i32_1 = arith.constant 0 : i32
    return %c0_i32, %c0_i32_0 : i32, i32
  }
  func.func @transform_6(%arg0: i32) -> (i32, i32) {
    %c0_i32 = arith.constant 0 : i32
    %c0_i32_0 = arith.constant 0 : i32
    %c0_i32_1 = arith.constant 0 : i32
    return %c0_i32, %c0_i32_0 : i32, i32
  }
  func.func @transform_7(%arg0: i32) -> (i32, i32) {
    %c0_i32 = arith.constant 0 : i32
    %c0_i32_0 = arith.constant 0 : i32
    return %arg0, %c0_i32 : i32, i32
  }
}

module attributes {stable_mosaic.version = 11 : i64} {
  func.func @critic_kernel(%arg0: i32, %arg1: memref<8x16xf32, #tpu.memory_space<vmem>>, %arg2: memref<16x128xbf16, #tpu.memory_space<vmem>>, %arg3: memref<1x128xf32, #tpu.memory_space<vmem>>, %arg4: memref<128x128xbf16, #tpu.memory_space<vmem>>, %arg5: memref<1x128xf32, #tpu.memory_space<vmem>>, %arg6: memref<1x128xbf16, #tpu.memory_space<vmem>>, %arg7: memref<1x1xf32, #tpu.memory_space<smem>>, %arg8: memref<8x1xf32, #tpu.memory_space<vmem>>) attributes {dimension_semantics = [#tpu.dimension_semantics<parallel>], iteration_bounds = array<i64: 1>, scalar_prefetch = 0 : i64, scratch_operands = 0 : i64, tpu.core_type = #tpu.core_type<tc>, window_params = [{transform_indices = @transform_0, window_bounds = array<i64: 8, 16>}, {pipeline_mode = #tpu.pipeline_mode<synchronous>, transform_indices = @transform_1, window_bounds = array<i64: 16, 128>}, {pipeline_mode = #tpu.pipeline_mode<synchronous>, transform_indices = @transform_2, window_bounds = array<i64: 1, 128>}, {pipeline_mode = #tpu.pipeline_mode<synchronous>, transform_indices = @transform_3, window_bounds = array<i64: 128, 128>}, {pipeline_mode = #tpu.pipeline_mode<synchronous>, transform_indices = @transform_4, window_bounds = array<i64: 1, 128>}, {pipeline_mode = #tpu.pipeline_mode<synchronous>, transform_indices = @transform_5, window_bounds = array<i64: 1, 128>}, {transform_indices = @transform_6, window_bounds = array<i64: 1, 1>}, {transform_indices = @transform_7, window_bounds = array<i64: 8, 1>}]} {
    %c0 = arith.constant 0 : index
    %c0_0 = arith.constant 0 : index
    %0 = vector.load %arg1[%c0, %c0_0] : memref<8x16xf32, #tpu.memory_space<vmem>>, vector<8x16xf32>
    %1 = arith.truncf %0 : vector<8x16xf32> to vector<8x16xbf16>
    %c0_1 = arith.constant 0 : index
    %c0_2 = arith.constant 0 : index
    %2 = vector.load %arg2[%c0_1, %c0_2] : memref<16x128xbf16, #tpu.memory_space<vmem>>, vector<16x128xbf16>
    %cst = arith.constant dense<0.000000e+00> : vector<8x128xf32>
    %3 = tpu.matmul %1, %2, %cst {dimension_numbers = #tpu.dot_dimension_numbers<[1], [0], [0], [1], [0, 0, 1, 1], [], []>} : vector<8x16xbf16>, vector<16x128xbf16>, vector<8x128xf32> -> vector<8x128xf32>
    %c0_3 = arith.constant 0 : index
    %c0_4 = arith.constant 0 : index
    %4 = vector.load %arg3[%c0_3, %c0_4] : memref<1x128xf32, #tpu.memory_space<vmem>>, vector<1x128xf32>
    %5 = vector.broadcast %4 : vector<1x128xf32> to vector<8x128xf32>
    %6 = arith.addf %3, %5 : vector<8x128xf32>
    %cst_5 = arith.constant 0.000000e+00 : f32
    %7 = vector.broadcast %cst_5 : f32 to vector<8x128xf32>
    %8 = arith.maximumf %6, %7 : vector<8x128xf32>
    %9 = arith.truncf %8 : vector<8x128xf32> to vector<8x128xbf16>
    %c0_6 = arith.constant 0 : index
    %c0_7 = arith.constant 0 : index
    %10 = vector.load %arg4[%c0_6, %c0_7] : memref<128x128xbf16, #tpu.memory_space<vmem>>, vector<128x128xbf16>
    %cst_8 = arith.constant dense<0.000000e+00> : vector<8x128xf32>
    %11 = tpu.matmul %9, %10, %cst_8 {dimension_numbers = #tpu.dot_dimension_numbers<[1], [0], [0], [1], [0, 0, 1, 1], [], []>} : vector<8x128xbf16>, vector<128x128xbf16>, vector<8x128xf32> -> vector<8x128xf32>
    %c0_9 = arith.constant 0 : index
    %c0_10 = arith.constant 0 : index
    %12 = vector.load %arg5[%c0_9, %c0_10] : memref<1x128xf32, #tpu.memory_space<vmem>>, vector<1x128xf32>
    %13 = vector.broadcast %12 : vector<1x128xf32> to vector<8x128xf32>
    %14 = arith.addf %11, %13 : vector<8x128xf32>
    %cst_11 = arith.constant 0.000000e+00 : f32
    %15 = vector.broadcast %cst_11 : f32 to vector<8x128xf32>
    %16 = arith.maximumf %14, %15 : vector<8x128xf32>
    %c0_12 = arith.constant 0 : index
    %c0_13 = arith.constant 0 : index
    %17 = vector.load %arg6[%c0_12, %c0_13] : memref<1x128xbf16, #tpu.memory_space<vmem>>, vector<1x128xbf16>
    %18 = arith.extf %17 : vector<1x128xbf16> to vector<1x128xf32>
    %19 = vector.broadcast %18 : vector<1x128xf32> to vector<8x128xf32>
    %20 = arith.mulf %16, %19 : vector<8x128xf32>
    %cst_14 = arith.constant dense<0.000000e+00> : vector<8xf32>
    %21 = vector.multi_reduction <add>, %20, %cst_14 [1] : vector<8x128xf32> to vector<8xf32>
    %22 = vector.shape_cast %21 : vector<8xf32> to vector<8x1xf32>
    %c0_15 = arith.constant 0 : index
    %c0_16 = arith.constant 0 : index
    %23 = memref.load %arg7[%c0_15, %c0_16] : memref<1x1xf32, #tpu.memory_space<smem>>
    %24 = vector.broadcast %23 : f32 to vector<8x1xf32>
    %25 = arith.addf %22, %24 : vector<8x1xf32>
    %c0_17 = arith.constant 0 : index
    %c0_18 = arith.constant 0 : index
    %26 = vector.load %arg8[%c0_17, %c0_18] : memref<8x1xf32, #tpu.memory_space<vmem>>, vector<8x1xf32>
    tpu.vector_store %arg8[%c0_17, %c0_18], %25 {strides = array<i32>} : memref<8x1xf32, #tpu.memory_space<vmem>>, vector<8x1xf32>,
    return
  }
  func.func @transform_0(%arg0: i32) -> (i32, i32) {
    %c0_i32 = arith.constant 0 : i32
    %c0_i32_0 = arith.constant 0 : i32
    return %arg0, %c0_i32 : i32, i32
  }
  func.func @transform_1(%arg0: i32) -> (i32, i32) {
    %c0_i32 = arith.constant 0 : i32
    %c0_i32_0 = arith.constant 0 : i32
    %c0_i32_1 = arith.constant 0 : i32
    return %c0_i32, %c0_i32_0 : i32, i32
  }
  func.func @transform_2(%arg0: i32) -> (i32, i32) {
    %c0_i32 = arith.constant 0 : i32
    %c0_i32_0 = arith.constant 0 : i32
    %c0_i32_1 = arith.constant 0 : i32
    return %c0_i32, %c0_i32_0 : i32, i32
  }
  func.func @transform_3(%arg0: i32) -> (i32, i32) {
    %c0_i32 = arith.constant 0 : i32
    %c0_i32_0 = arith.constant 0 : i32
    %c0_i32_1 = arith.constant 0 : i32
    return %c0_i32, %c0_i32_0 : i32, i32
  }
  func.func @transform_4(%arg0: i32) -> (i32, i32) {
    %c0_i32 = arith.constant 0 : i32
    %c0_i32_0 = arith.constant 0 : i32
    %c0_i32_1 = arith.constant 0 : i32
    return %c0_i32, %c0_i32_0 : i32, i32
  }
  func.func @transform_5(%arg0: i32) -> (i32, i32) {
    %c0_i32 = arith.constant 0 : i32
    %c0_i32_0 = arith.constant 0 : i32
    %c0_i32_1 = arith.constant 0 : i32
    return %c0_i32, %c0_i32_0 : i32, i32
  }
  func.func @transform_6(%arg0: i32) -> (i32, i32) {
    %c0_i32 = arith.constant 0 : i32
    %c0_i32_0 = arith.constant 0 : i32
    %c0_i32_1 = arith.constant 0 : i32
    return %c0_i32, %c0_i32_0 : i32, i32
  }
  func.func @transform_7(%arg0: i32) -> (i32, i32) {
    %c0_i32 = arith.constant 0 : i32
    %c0_i32_0 = arith.constant 0 : i32
    return %arg0, %c0_i32 : i32, i32
  }
}

</mosaic_0001>

<llo_original>
// kernel: _critic_pallas.1
$region0: #{_critic_pallas.1}
  #allocation0 [shape = 'u32[]', space=smem, size = 0x4, offset = 0x4, fixed_abs, tag = 'smem constant byte address 0x4 - core index']
  #allocation1 [shape = 'u32[72,128]{1,0:T(1,128)}', space=vmem, size = 0x9000, scoped, tag = 'internal scratch']
  #allocation2 [shape = 'f32[1,1]{1,0:T(1,128)S(6)}', space=smem, size = 0x200, scoped, tag = 'scoped memory for _critic_pallas.1']
  %s0 = inlined_call_operand.hbm [shape: f32[8,16], index: 0, kind: input, shape index: {}]
  %s1 = inlined_call_operand.hbm [shape: bf16[16,128], index: 1, kind: input, shape index: {}]
  %s2 = inlined_call_operand.vmem [shape: f32[1,128], index: 2, kind: input, shape index: {}]
  %s3 = inlined_call_operand.hbm [shape: bf16[128,128], index: 3, kind: input, shape index: {}]
  %s4 = inlined_call_operand.vmem [shape: f32[1,128], index: 4, kind: input, shape index: {}]
  %s5 = inlined_call_operand.vmem [shape: bf16[1,128], index: 5, kind: input, shape index: {}]
  %s6 = inlined_call_operand.<no memory space> [shape: f32[1,1], index: 6, kind: input, shape index: {}]
  %s7 = inlined_call_operand.vmem [shape: f32[8,1], index: 7, kind: output, shape index: {}]
  %s8 = sld [smem:[#allocation0]]
  $region50: #{_critic_pallas.1} parent=0
    _
  %s10 = ssub.s32 1, %s8
  %s11 = scalar_select 0, %s10, %s8
  %12 = sst [smem:[#allocation2]] %s6
  $region1: #{_critic_pallas.1} parent=0
    #allocation3 [shape = 'u8[4096]{0}', space=vmem, size = 0x1000, scoped, tag = 'input window, operand 0, single buffered']
    #allocation4 [shape = 's32[1]{0}', space=sflag, size = 0x4, scoped, tag = 'scoped memory for _critic_pallas.1']
    #allocation5 [shape = 'u8[4096]{0}', space=vmem, size = 0x1000, scoped, tag = 'input window, operand 1, single buffered']
    #allocation6 [shape = 's32[1]{0}', space=sflag, size = 0x4, scoped, tag = 'scoped memory for _critic_pallas.1']
    #allocation7 [shape = 'u8[32768]{0}', space=vmem, size = 0x8000, scoped, tag = 'input window, operand 3, single buffered']
    %13 = vsyncpa [#allocation4], 0
    %14 = vsyncpa [#allocation6], 0
    // Predicated region
    $region2: #{_critic_pallas.1} parent=1 // pred_check
      _
    $region3: #{_critic_pallas.1} parent=1 // pred_check_branch
      %16 = sbr.rel (0) target = $region5
    $region4: #{_critic_pallas.1} parent=1 // pred_region
      %18 = vsyncadd [#allocation4], 0
      %s20 = sshll.u32 %s0, 4
      %s21 = int_to_ptr.hbm [resolvable:$true] %s20
      %s22 = sshll.u32 [#allocation3], 4
      %s23 = int_to_ptr.vmem [resolvable:$true] %s22
      %25 = dma.hbm_to_vmem [thread:$0]  %s21, 128, %s23, [#allocation4]
    $region5: #{_critic_pallas.1} parent=1 // pred_fallthru
      _
    // Predicated region
    $region6: #{_critic_pallas.1} parent=1 // pred_check
      _
    $region7: #{_critic_pallas.1} parent=1 // pred_check_branch
      %27 = sbr.rel (0) target = $region9
    $region8: #{_critic_pallas.1} parent=1 // pred_region
      %29 = vsyncadd [#allocation6], 0
      %s30 = sshll.u32 %s1, 4
      %s31 = int_to_ptr.hbm [resolvable:$true] %s30
      %s32 = sshll.u32 [#allocation5], 4
      %s33 = int_to_ptr.vmem [resolvable:$true] %s32
      %38 = dma.hbm_to_vmem [thread:$0]  %s31, 128, %s33, [#allocation6], 64, 64, 4
    $region9: #{_critic_pallas.1} parent=1 // pred_fallthru
      _
    // Predicated region
    $region10: #{_critic_pallas.1} parent=1 // pred_check
      _
    $region11: #{_critic_pallas.1} parent=1 // pred_check_branch
      %40 = sbr.rel (0) target = $region13
    $region12: #{_critic_pallas.1} parent=1 // pred_region
      _
    $region13: #{_critic_pallas.1} parent=1 // pred_fallthru
      _
    // Predicated region
    $region14: #{_critic_pallas.1} parent=1 // pred_check
      _
    $region15: #{_critic_pallas.1} parent=1 // pred_check_branch
      %42 = sbr.rel (0) target = $region17
    $region16: #{_critic_pallas.1} parent=1 // pred_region
      %44 = vsyncadd [#allocation6], 0
      %s45 = sshll.u32 %s3, 4
      %s46 = int_to_ptr.hbm [resolvable:$true] %s45
      %s47 = sshll.u32 [#allocation7], 4
      %s48 = int_to_ptr.vmem [resolvable:$true] %s47
      %53 = dma.hbm_to_vmem [thread:$0]  %s46, 1024, %s48, [#allocation6], 64, 64, 4
    $region17: #{_critic_pallas.1} parent=1 // pred_fallthru
      _
    // Predicated region
    $region18: #{_critic_pallas.1} parent=1 // pred_check
      _
    $region19: #{_critic_pallas.1} parent=1 // pred_check_branch
      %55 = sbr.rel (0) target = $region21
    $region20: #{_critic_pallas.1} parent=1 // pred_region
      _
    $region21: #{_critic_pallas.1} parent=1 // pred_fallthru
      _
    // Predicated region
    $region22: #{_critic_pallas.1} parent=1 // pred_check
      _
    $region23: #{_critic_pallas.1} parent=1 // pred_check_branch
      %57 = sbr.rel (0) target = $region25
    $region24: #{_critic_pallas.1} parent=1 // pred_region
      _
    $region25: #{_critic_pallas.1} parent=1 // pred_fallthru
      _
    // Predicated region
    $region26: #{_critic_pallas.1} parent=1 // pred_check
      _
    $region27: #{_critic_pallas.1} parent=1 // pred_check_branch
      %59 = sbr.rel (0) target = $region29
    $region28: #{_critic_pallas.1} parent=1 // pred_region
      _
    $region29: #{_critic_pallas.1} parent=1 // pred_fallthru
      _
    // Predicated region
    $region30: #{_critic_pallas.1} parent=1 // pred_check
      _
    $region31: #{_critic_pallas.1} parent=1 // pred_check_branch
      %61 = sbr.rel (0) target = $region33
    $region32: #{_critic_pallas.1} parent=1 // pred_region
      %63 = dma.done [#allocation4], 128
    $region33: #{_critic_pallas.1} parent=1 // pred_fallthru
      _
    // Predicated region
    $region34: #{_critic_pallas.1} parent=1 // pred_check
      _
    $region35: #{_critic_pallas.1} parent=1 // pred_check_branch
      %65 = sbr.rel (0) target = $region37
    $region36: #{_critic_pallas.1} parent=1 // pred_region
      %67 = dma.done [#allocation6], 128
    $region37: #{_critic_pallas.1} parent=1 // pred_fallthru
      _
    // Predicated region
    $region38: #{_critic_pallas.1} parent=1 // pred_check
      _
    $region39: #{_critic_pallas.1} parent=1 // pred_check_branch
      %69 = sbr.rel (0) target = $region41
    $region40: #{_critic_pallas.1} parent=1 // pred_region
      %71 = dma.done [#allocation6], 1024
    $region41: #{_critic_pallas.1} parent=1 // pred_fallthru
      _
    %v73 = vld [vmem:[#allocation3] sm:$0xff]
    %v74 = vpack.c.bf16 %v73, %v73
    %v75 = vld [vmem:[#allocation5] sm:$0xf]
    %v76 = vld [vmem:[#allocation5 + $0x4] sm:$0xf]
    %v77 = vld [vmem:[%s2] sm:$0x1]
    %v79 = vperm.slane %v77, 0
    %v83 = vunpack.c.l.b16 %v75
    %v84 = vunpack.c.l.b16 %v76
    %v85 = vpack.c.b16 %v84, %v83
    %vm87 = vcmask 130048
    %v89 = vsel %vm87, %v74, 0
    %91 = vmatpush.bf16.msra.mxu0 0
    %92 = vmatpush.bf16.msra.mxu0 0
    %93 = vmatpush.bf16.msra.mxu0 0
    %94 = vmatpush.bf16.msra.mxu0 0
    %95 = vmatpush.bf16.msra.mxu0 0
    %96 = vmatpush.bf16.msra.mxu0 0
    %97 = vmatpush.bf16.msra.mxu0 0
    %98 = vmatpush.bf16.msra.mxu0 %v85
    %99 = vmatmul.bf16.gmra.mxu0 %v89
    %v100 = vpop.f32.mrf.mxu0
    %v101 = vadd.f32 %v79, %v100
    %v102 = vpop.f32.mrf.mxu0
    %103 = vdwg.mxu0
    %v104 = vmax.f32 %v101, 0.0
    %v105 = vpack.c.bf16 %v104, %v104
    %v106 = vld [vmem:[#allocation7] sm:$0xf]
    %v107 = vld [vmem:[#allocation7 + $0x4] sm:$0xf]
    %v108 = vld [vmem:[#allocation7 + $0x8] sm:$0xf]
    %v109 = vld [vmem:[#allocation7 + $0xc] sm:$0xf]
    %v110 = vld [vmem:[#allocation7 + $0x10] sm:$0xf]
    %v111 = vld [vmem:[#allocation7 + $0x14] sm:$0xf]
    %v112 = vld [vmem:[#allocation7 + $0x18] sm:$0xf]
    %v113 = vld [vmem:[#allocation7 + $0x1c] sm:$0xf]
    %v114 = vld [vmem:[#allocation7 + $0x20] sm:$0xf]
    %v115 = vld [vmem:[#allocation7 + $0x24] sm:$0xf]
    %v116 = vld [vmem:[#allocation7 + $0x28] sm:$0xf]
    %v117 = vld [vmem:[#allocation7 + $0x2c] sm:$0xf]
    %v118 = vld [vmem:[#allocation7 + $0x30] sm:$0xf]
    %v119 = vld [vmem:[#allocation7 + $0x34] sm:$0xf]
    %v120 = vld [vmem:[#allocation7 + $0x38] sm:$0xf]
    %v121 = vld [vmem:[#allocation7 + $0x3c] sm:$0xf]
    %v122 = vld [vmem:[%s4] sm:$0x1]
    %v124 = vperm.slane %v122, 0
    %v142 = vunpack.c.l.b16 %v106
    %v143 = vunpack.c.l.b16 %v107
    %v144 = vunpack.c.l.b16 %v108
    %v145 = vunpack.c.l.b16 %v109
    %v146 = vunpack.c.l.b16 %v110
    %v147 = vunpack.c.l.b16 %v111
    %v148 = vunpack.c.l.b16 %v112
    %v149 = vunpack.c.l.b16 %v113
    %v150 = vunpack.c.l.b16 %v114
    %v151 = vunpack.c.l.b16 %v115
    %v152 = vunpack.c.l.b16 %v116
    %v153 = vunpack.c.l.b16 %v117
    %v154 = vunpack.c.l.b16 %v118
    %v155 = vunpack.c.l.b16 %v119
    %v156 = vunpack.c.l.b16 %v120
    %v157 = vunpack.c.l.b16 %v121
    %v158 = vpack.c.b16 %v143, %v142
    %v159 = vpack.c.b16 %v145, %v144
    %v160 = vpack.c.b16 %v147, %v146
    %v161 = vpack.c.b16 %v149, %v148
    %v162 = vpack.c.b16 %v151, %v150
    %v163 = vpack.c.b16 %v153, %v152
    %v164 = vpack.c.b16 %v155, %v154
    %v165 = vpack.c.b16 %v157, %v156
    %174 = vmatpush.bf16.msra.mxu0 %v165
    %175 = vmatpush.bf16.msra.mxu0 %v164
    %176 = vmatpush.bf16.msra.mxu0 %v163
    %177 = vmatpush.bf16.msra.mxu0 %v162
    %178 = vmatpush.bf16.msra.mxu0 %v161
    %179 = vmatpush.bf16.msra.mxu0 %v160
    %180 = vmatpush.bf16.msra.mxu0 %v159
    %181 = vmatpush.bf16.msra.mxu0 %v158
    %182 = vmatmul.bf16.gmra.mxu0 %v105
    %v183 = vpop.f32.mrf.mxu0
    %v184 = vadd.f32 %v124, %v183
    %v185 = vpop.f32.mrf.mxu0
    %186 = vdwg.mxu0
    %v187 = vmax.f32 %v184, 0.0
    %v188 = vld [vmem:[%s5] sm:$0x1]
    %v189 = vunpack.c.l.bf16 %v188
    %v190 = vperm.slane %v189, 0
    %v191 = vmul.f32 %v187, %v190
    %192 = vadd.xlane.f32.xlu0 %v191
    %v193 = vpop.xlane.xlu0 %192
    %s194 = sld [smem:[#allocation2]]
    %v195 = vstv %s194
    %v196 = vadd.f32 %v193, %v195
    %vm197 = vcmask 7168
    %198 = vst.msk [vmem:[%s7] sm:$0xff] %vm197, %v196
    // Predicated region
    $region42: #{_critic_pallas.1} parent=1 // pred_check
      _
    $region43: #{_critic_pallas.1} parent=1 // pred_check_branch
      %200 = sbr.rel (0) target = $region45
    $region44: #{_critic_pallas.1} parent=1 // pred_region
      _
    $region45: #{_critic_pallas.1} parent=1 // pred_fallthru
      _
    // Predicated region
    $region46: #{_critic_pallas.1} parent=1 // pred_check
      _
    $region47: #{_critic_pallas.1} parent=1 // pred_check_branch
      %202 = sbr.rel (0) target = $region49
    $region48: #{_critic_pallas.1} parent=1 // pred_region
      _
    $region49: #{_critic_pallas.1} parent=1 // pred_fallthru
      _
    %203 = vsyncpa [#allocation4], 1
    %204 = vsyncpa [#allocation6], 1

// kernel: _critic_pallas.1
$region0: #{_critic_pallas.1}
  #allocation0 [shape = 'u32[]', space=smem, size = 0x4, offset = 0x4, fixed_abs, tag = 'smem constant byte address 0x4 - core index']
  #allocation1 [shape = 'u32[72,128]{1,0:T(1,128)}', space=vmem, size = 0x9000, scoped, tag = 'internal scratch']
  #allocation2 [shape = 'f32[1,1]{1,0:T(1,128)S(6)}', space=smem, size = 0x200, scoped, tag = 'scoped memory for _critic_pallas.1']
  %s0 = inlined_call_operand.hbm [shape: f32[8,16], index: 0, kind: input, shape index: {}]
  %s1 = inlined_call_operand.hbm [shape: bf16[16,128], index: 1, kind: input, shape index: {}]
  %s2 = inlined_call_operand.vmem [shape: f32[1,128], index: 2, kind: input, shape index: {}]
  %s3 = inlined_call_operand.hbm [shape: bf16[128,128], index: 3, kind: input, shape index: {}]
  %s4 = inlined_call_operand.vmem [shape: f32[1,128], index: 4, kind: input, shape index: {}]
  %s5 = inlined_call_operand.vmem [shape: bf16[1,128], index: 5, kind: input, shape index: {}]
  %s6 = inlined_call_operand.<no memory space> [shape: f32[1,1], index: 6, kind: input, shape index: {}]
  %s7 = inlined_call_operand.vmem [shape: f32[8,1], index: 7, kind: output, shape index: {}]
  %s8 = sld [smem:[#allocation0]]
  $region50: #{_critic_pallas.1} parent=0
    _
  %s10 = ssub.s32 1, %s8
  %s11 = scalar_select 0, %s10, %s8
  %12 = sst [smem:[#allocation2]] %s6
  $region1: #{_critic_pallas.1} parent=0
    #allocation3 [shape = 'u8[4096]{0}', space=vmem, size = 0x1000, scoped, tag = 'input window, operand 0, single buffered']
    #allocation4 [shape = 's32[1]{0}', space=sflag, size = 0x4, scoped, tag = 'scoped memory for _critic_pallas.1']
    #allocation5 [shape = 'u8[4096]{0}', space=vmem, size = 0x1000, scoped, tag = 'input window, operand 1, single buffered']
    #allocation6 [shape = 's32[1]{0}', space=sflag, size = 0x4, scoped, tag = 'scoped memory for _critic_pallas.1']
    #allocation7 [shape = 'u8[32768]{0}', space=vmem, size = 0x8000, scoped, tag = 'input window, operand 3, single buffered']
    %13 = vsyncpa [#allocation4], 0
    %14 = vsyncpa [#allocation6], 0
    // Predicated region
    $region2: #{_critic_pallas.1} parent=1 // pred_check
      _
    $region3: #{_critic_pallas.1} parent=1 // pred_check_branch
      %16 = sbr.rel (0) target = $region5
    $region4: #{_critic_pallas.1} parent=1 // pred_region
      %18 = vsyncadd [#allocation4], 0
      %s20 = sshll.u32 %s0, 4
      %s21 = int_to_ptr.hbm [resolvable:$true] %s20
      %s22 = sshll.u32 [#allocation3], 4
      %s23 = int_to_ptr.vmem [resolvable:$true] %s22
      %25 = dma.hbm_to_vmem [thread:$0]  %s21, 128, %s23, [#allocation4]
    $region5: #{_critic_pallas.1} parent=1 // pred_fallthru
      _
    // Predicated region
    $region6: #{_critic_pallas.1} parent=1 // pred_check
      _
    $region7: #{_critic_pallas.1} parent=1 // pred_check_branch
      %27 = sbr.rel (0) target = $region9
    $region8: #{_critic_pallas.1} parent=1 // pred_region
      %29 = vsyncadd [#allocation6], 0
      %s30 = sshll.u32 %s1, 4
      %s31 = int_to_ptr.hbm [resolvable:$true] %s30
      %s32 = sshll.u32 [#allocation5], 4
      %s33 = int_to_ptr.vmem [resolvable:$true] %s32
      %38 = dma.hbm_to_vmem [thread:$0]  %s31, 128, %s33, [#allocation6], 64, 64, 4
    $region9: #{_critic_pallas.1} parent=1 // pred_fallthru
      _
    // Predicated region
    $region10: #{_critic_pallas.1} parent=1 // pred_check
      _
    $region11: #{_critic_pallas.1} parent=1 // pred_check_branch
      %40 = sbr.rel (0) target = $region13
    $region12: #{_critic_pallas.1} parent=1 // pred_region
      _
    $region13: #{_critic_pallas.1} parent=1 // pred_fallthru
      _
    // Predicated region
    $region14: #{_critic_pallas.1} parent=1 // pred_check
      _
    $region15: #{_critic_pallas.1} parent=1 // pred_check_branch
      %42 = sbr.rel (0) target = $region17
    $region16: #{_critic_pallas.1} parent=1 // pred_region
      %44 = vsyncadd [#allocation6], 0
      %s45 = sshll.u32 %s3, 4
      %s46 = int_to_ptr.hbm [resolvable:$true] %s45
      %s47 = sshll.u32 [#allocation7], 4
      %s48 = int_to_ptr.vmem [resolvable:$true] %s47
      %53 = dma.hbm_to_vmem [thread:$0]  %s46, 1024, %s48, [#allocation6], 64, 64, 4
    $region17: #{_critic_pallas.1} parent=1 // pred_fallthru
      _
    // Predicated region
    $region18: #{_critic_pallas.1} parent=1 // pred_check
      _
    $region19: #{_critic_pallas.1} parent=1 // pred_check_branch
      %55 = sbr.rel (0) target = $region21
    $region20: #{_critic_pallas.1} parent=1 // pred_region
      _
    $region21: #{_critic_pallas.1} parent=1 // pred_fallthru
      _
    // Predicated region
    $region22: #{_critic_pallas.1} parent=1 // pred_check
      _
    $region23: #{_critic_pallas.1} parent=1 // pred_check_branch
      %57 = sbr.rel (0) target = $region25
    $region24: #{_critic_pallas.1} parent=1 // pred_region
      _
    $region25: #{_critic_pallas.1} parent=1 // pred_fallthru
      _
    // Predicated region
    $region26: #{_critic_pallas.1} parent=1 // pred_check
      _
    $region27: #{_critic_pallas.1} parent=1 // pred_check_branch
      %59 = sbr.rel (0) target = $region29
    $region28: #{_critic_pallas.1} parent=1 // pred_region
      _
    $region29: #{_critic_pallas.1} parent=1 // pred_fallthru
      _
    // Predicated region
    $region30: #{_critic_pallas.1} parent=1 // pred_check
      _
    $region31: #{_critic_pallas.1} parent=1 // pred_check_branch
      %61 = sbr.rel (0) target = $region33
    $region32: #{_critic_pallas.1} parent=1 // pred_region
      %63 = dma.done [#allocation4], 128
    $region33: #{_critic_pallas.1} parent=1 // pred_fallthru
      _
    // Predicated region
    $region34: #{_critic_pallas.1} parent=1 // pred_check
      _
    $region35: #{_critic_pallas.1} parent=1 // pred_check_branch
      %65 = sbr.rel (0) target = $region37
    $region36: #{_critic_pallas.1} parent=1 // pred_region
      %67 = dma.done [#allocation6], 128
    $region37: #{_critic_pallas.1} parent=1 // pred_fallthru
      _
    // Predicated region
    $region38: #{_critic_pallas.1} parent=1 // pred_check
      _
    $region39: #{_critic_pallas.1} parent=1 // pred_check_branch
      %69 = sbr.rel (0) target = $region41
    $region40: #{_critic_pallas.1} parent=1 // pred_region
      %71 = dma.done [#allocation6], 1024
    $region41: #{_critic_pallas.1} parent=1 // pred_fallthru
      _
    %v73 = vld [vmem:[#allocation3] sm:$0xff]
    %v74 = vpack.c.bf16 %v73, %v73
    %v75 = vld [vmem:[#allocation5] sm:$0xf]
    %v76 = vld [vmem:[#allocation5 + $0x4] sm:$0xf]
    %v77 = vld [vmem:[%s2] sm:$0x1]
    %v79 = vperm.slane %v77, 0
    %v83 = vunpack.c.l.b16 %v75
    %v84 = vunpack.c.l.b16 %v76
    %v85 = vpack.c.b16 %v84, %v83
    %vm87 = vcmask 130048
    %v89 = vsel %vm87, %v74, 0
    %91 = vmatpush.bf16.msra.mxu0 0
    %92 = vmatpush.bf16.msra.mxu0 0
    %93 = vmatpush.bf16.msra.mxu0 0
    %94 = vmatpush.bf16.msra.mxu0 0
    %95 = vmatpush.bf16.msra.mxu0 0
    %96 = vmatpush.bf16.msra.mxu0 0
    %97 = vmatpush.bf16.msra.mxu0 0
    %98 = vmatpush.bf16.msra.mxu0 %v85
    %99 = vmatmul.bf16.gmra.mxu0 %v89
    %v100 = vpop.f32.mrf.mxu0
    %v101 = vadd.f32 %v79, %v100
    %v102 = vpop.f32.mrf.mxu0
    %103 = vdwg.mxu0
    %v104 = vmax.f32 %v101, 0.0
    %v105 = vpack.c.bf16 %v104, %v104
    %v106 = vld [vmem:[#allocation7] sm:$0xf]
    %v107 = vld [vmem:[#allocation7 + $0x4] sm:$0xf]
    %v108 = vld [vmem:[#allocation7 + $0x8] sm:$0xf]
    %v109 = vld [vmem:[#allocation7 + $0xc] sm:$0xf]
    %v110 = vld [vmem:[#allocation7 + $0x10] sm:$0xf]
    %v111 = vld [vmem:[#allocation7 + $0x14] sm:$0xf]
    %v112 = vld [vmem:[#allocation7 + $0x18] sm:$0xf]
    %v113 = vld [vmem:[#allocation7 + $0x1c] sm:$0xf]
    %v114 = vld [vmem:[#allocation7 + $0x20] sm:$0xf]
    %v115 = vld [vmem:[#allocation7 + $0x24] sm:$0xf]
    %v116 = vld [vmem:[#allocation7 + $0x28] sm:$0xf]
    %v117 = vld [vmem:[#allocation7 + $0x2c] sm:$0xf]
    %v118 = vld [vmem:[#allocation7 + $0x30] sm:$0xf]
    %v119 = vld [vmem:[#allocation7 + $0x34] sm:$0xf]
    %v120 = vld [vmem:[#allocation7 + $0x38] sm:$0xf]
    %v121 = vld [vmem:[#allocation7 + $0x3c] sm:$0xf]
    %v122 = vld [vmem:[%s4] sm:$0x1]
    %v124 = vperm.slane %v122, 0
    %v142 = vunpack.c.l.b16 %v106
    %v143 = vunpack.c.l.b16 %v107
    %v144 = vunpack.c.l.b16 %v108
    %v145 = vunpack.c.l.b16 %v109
    %v146 = vunpack.c.l.b16 %v110
    %v147 = vunpack.c.l.b16 %v111
    %v148 = vunpack.c.l.b16 %v112
    %v149 = vunpack.c.l.b16 %v113
    %v150 = vunpack.c.l.b16 %v114
    %v151 = vunpack.c.l.b16 %v115
    %v152 = vunpack.c.l.b16 %v116
    %v153 = vunpack.c.l.b16 %v117
    %v154 = vunpack.c.l.b16 %v118
    %v155 = vunpack.c.l.b16 %v119
    %v156 = vunpack.c.l.b16 %v120
    %v157 = vunpack.c.l.b16 %v121
    %v158 = vpack.c.b16 %v143, %v142
    %v159 = vpack.c.b16 %v145, %v144
    %v160 = vpack.c.b16 %v147, %v146
    %v161 = vpack.c.b16 %v149, %v148
    %v162 = vpack.c.b16 %v151, %v150
    %v163 = vpack.c.b16 %v153, %v152
    %v164 = vpack.c.b16 %v155, %v154
    %v165 = vpack.c.b16 %v157, %v156
    %174 = vmatpush.bf16.msra.mxu0 %v165
    %175 = vmatpush.bf16.msra.mxu0 %v164
    %176 = vmatpush.bf16.msra.mxu0 %v163
    %177 = vmatpush.bf16.msra.mxu0 %v162
    %178 = vmatpush.bf16.msra.mxu0 %v161
    %179 = vmatpush.bf16.msra.mxu0 %v160
    %180 = vmatpush.bf16.msra.mxu0 %v159
    %181 = vmatpush.bf16.msra.mxu0 %v158
    %182 = vmatmul.bf16.gmra.mxu0 %v105
    %v183 = vpop.f32.mrf.mxu0
    %v184 = vadd.f32 %v124, %v183
    %v185 = vpop.f32.mrf.mxu0
    %186 = vdwg.mxu0
    %v187 = vmax.f32 %v184, 0.0
    %v188 = vld [vmem:[%s5] sm:$0x1]
    %v189 = vunpack.c.l.bf16 %v188
    %v190 = vperm.slane %v189, 0
    %v191 = vmul.f32 %v187, %v190
    %192 = vadd.xlane.f32.xlu0 %v191
    %v193 = vpop.xlane.xlu0 %192
    %s194 = sld [smem:[#allocation2]]
    %v195 = vstv %s194
    %v196 = vadd.f32 %v193, %v195
    %vm197 = vcmask 7168
    %198 = vst.msk [vmem:[%s7] sm:$0xff] %vm197, %v196
    // Predicated region
    $region42: #{_critic_pallas.1} parent=1 // pred_check
      _
    $region43: #{_critic_pallas.1} parent=1 // pred_check_branch
      %200 = sbr.rel (0) target = $region45
    $region44: #{_critic_pallas.1} parent=1 // pred_region
      _
    $region45: #{_critic_pallas.1} parent=1 // pred_fallthru
      _
    // Predicated region
    $region46: #{_critic_pallas.1} parent=1 // pred_check
      _
    $region47: #{_critic_pallas.1} parent=1 // pred_check_branch
      %202 = sbr.rel (0) target = $region49
    $region48: #{_critic_pallas.1} parent=1 // pred_region
      _
    $region49: #{_critic_pallas.1} parent=1 // pred_fallthru
      _
    %203 = vsyncpa [#allocation4], 1
    %204 = vsyncpa [#allocation6], 1

</llo_original>
